<compile_context>
chip_gen: v7x
topology: tpu7x:2x2x1
jax: 0.10.0
libtpu: 0.0.40
codegen_flags: <defaults>
</compile_context>

<pallas_src>
import numpy as np
import jax
import jax.numpy as jnp
from jax.experimental import pallas as pl
from jax.experimental.pallas import tpu as pltpu

_LANE = 128            # lane width of a vreg
_SUBLANE = 8           # sublane count of a f32 vreg
_MAX_BLOCK_ROWS = 512  # rows of 128 lanes per grid step per parameter
                       # -> fused (2, 512, 128) f32 block = 512 KiB


def _softplus(v):
    # PyTorch F.softplus semantics (beta=1, threshold=20):
    #   softplus(x) = x               if x > 20
    #               = log1p(exp(x))   otherwise   (min() guards exp overflow
    #                                              in the unselected branch)
    return jnp.where(v > 20.0, v, jnp.log1p(jnp.exp(jnp.minimum(v, 20.0))))


def _const_param_kernel(w_ref, out_ref):
    # w_ref:   (2,) f32 in SMEM  -> [beta_raw, alpha_raw] scalars
    # out_ref: (2, block_rows, 128) f32 in VMEM -> [beta rows; alpha rows]
    #
    # Softplus runs once per parameter on a single (1,128) vreg (one EUP push),
    # then a cheap sublane broadcast feeds full-lane, full-sublane stores.
    block_rows = out_ref.shape[1]
    beta_row = _softplus(jnp.full((1, _LANE), w_ref[0], jnp.float32))
    alpha_row = _softplus(jnp.full((1, _LANE), w_ref[1], jnp.float32))
    out_ref[0] = jnp.broadcast_to(beta_row, (block_rows, _LANE))
    out_ref[1] = jnp.broadcast_to(alpha_row, (block_rows, _LANE))


def parameter_prediction_net_constant(x_list, anneal_weights):
    """Pallas implementation of ParameterPredictionNetConstant.forward.

    Args:
      x_list: list/tuple of arrays; only x_list[0].shape[0] (batch) is used.
      anneal_weights: (2 + prod(weights_dim),) f32 parameter vector.

    Returns:
      (beta, alpha): each of shape (batch,), f32.
    """
    batch = x_list[0].shape[0]

    # Sublane-dense layout: batch -> (rows, 128), rows padded to a multiple
    # of 8 so every output block is (8k, 128)-aligned (unmasked stores).
    rows = max(1, -(-batch // _LANE))                # ceil(batch / 128)
    rows = -(-rows // _SUBLANE) * _SUBLANE           # pad rows to multiple of 8
    if rows > _MAX_BLOCK_ROWS:
        block_rows = _MAX_BLOCK_ROWS
        rows = -(-rows // block_rows) * block_rows   # pad rows to block multiple
    else:
        block_rows = rows
    grid = (rows // block_rows,)

    w2 = anneal_weights[:2]
    if w2.dtype != jnp.float32:
        # Parameter is fp32 in the PyTorch module; cast only if caller differs.
        w2 = w2.astype(jnp.float32)

    out = pl.pallas_call(
        _const_param_kernel,
        out_shape=jax.ShapeDtypeStruct((2, rows, _LANE), jnp.float32),
        grid=grid,
        # Two f32 scalars live in SMEM; no VMEM input DMA at all.
        in_specs=[pl.BlockSpec(memory_space=pltpu.MemorySpace.SMEM)],
        # Single fused output spec for both parameters.
        out_specs=pl.BlockSpec((2, block_rows, _LANE), lambda j: (0, j, 0)),
        compiler_params=pltpu.CompilerParams(
            dimension_semantics=("parallel",),
        ),
        cost_estimate=pl.CostEstimate(
            flops=0,
            transcendentals=2,
            bytes_accessed=2 * rows * _LANE * 4,
        ),
    )(w2)

    beta = out[0].reshape(-1)[:batch]
    alpha = out[1].reshape(-1)[:batch]
    return beta, alpha


def init_params(weights_dim):
    # Matches nn.Parameter(torch.zeros(2 + np.prod(weights_dim)))
    n = 2 + int(np.prod(weights_dim))
    return jnp.zeros((n,), dtype=jnp.float32)


if __name__ == "__main__":
    key = jax.random.PRNGKey(0)

    # Small shapes consistent with the module's usage: x is a list whose first
    # element has a leading batch dimension (NCHW conv-style input).
    batch, channels, spatial = 2, 4, 16
    x0 = jax.random.normal(key, (batch, channels, spatial, spatial), dtype=jnp.float32)
    x = [x0]

    weights_dim = (2, 3)
    anneal_weights = init_params(weights_dim)

    beta, alpha = parameter_prediction_net_constant(x, anneal_weights)
    beta = jax.block_until_ready(beta)
    alpha = jax.block_until_ready(alpha)

    # Reference check: softplus(0) = log(2), broadcast to (batch,).
    ref = jnp.full((batch,), jnp.log1p(jnp.exp(0.0)), dtype=jnp.float32)
    assert beta.shape == (batch,) and alpha.shape == (batch,)
    np.testing.assert_allclose(np.asarray(beta), np.asarray(ref), rtol=1e-6, atol=1e-6)
    np.testing.assert_allclose(np.asarray(alpha), np.asarray(ref), rtol=1e-6, atol=1e-6)

    # Nonzero / mixed-sign weights (exercise both softplus branches) and a
    # batch that spans multiple 128-lane rows (exercise reshape/slice path).
    batch2 = 200
    x2 = [jnp.zeros((batch2, 1), dtype=jnp.float32)]
    aw2 = anneal_weights.at[0].set(25.0).at[1].set(-3.0)
    b2, a2 = parameter_prediction_net_constant(x2, aw2)
    b2 = jax.block_until_ready(b2)
    a2 = jax.block_until_ready(a2)
    assert b2.shape == (batch2,) and a2.shape == (batch2,)
    np.testing.assert_allclose(np.asarray(b2), np.full((batch2,), 25.0, np.float32),
                               rtol=1e-6, atol=1e-6)
    np.testing.assert_allclose(np.asarray(a2),
                               np.full((batch2,), np.log1p(np.exp(-3.0)), np.float32),
                               rtol=1e-6, atol=1e-6)

    print("KERNEL_OK")
</pallas_src>

<mosaic_0001>
module attributes {stable_mosaic.version = 11 : i64} {
  func.func @_const_param_kernel(%arg0: i32, %arg1: memref<2xf32, #tpu.memory_space<smem>>, %arg2: memref<2x8x128xf32, #tpu.memory_space<vmem>>) attributes {dimension_semantics = [#tpu.dimension_semantics<parallel>], iteration_bounds = array<i64: 1>, scalar_prefetch = 0 : i64, scratch_operands = 0 : i64, tpu.core_type = #tpu.core_type<tc>, window_params = [{transform_indices = @transform_0, window_bounds = array<i64: 2>}, {transform_indices = @transform_1, window_bounds = array<i64: 2, 8, 128>}]} {
    %c0 = arith.constant 0 : index
    %0 = memref.load %arg1[%c0] : memref<2xf32, #tpu.memory_space<smem>>
    %1 = vector.broadcast %0 : f32 to vector<1x128xf32>
    %cst = arith.constant 2.000000e+01 : f32
    %2 = vector.broadcast %cst : f32 to vector<1x128xf32>
    %3 = arith.cmpf ogt, %1, %2 : vector<1x128xf32>
    %cst_0 = arith.constant 2.000000e+01 : f32
    %4 = vector.broadcast %cst_0 : f32 to vector<1x128xf32>
    %5 = arith.minimumf %1, %4 : vector<1x128xf32>
    %6 = math.exp %5 : vector<1x128xf32>
    %7 = math.log1p %6 : vector<1x128xf32>
    %8 = arith.select %3, %1, %7 : vector<1x128xi1>, vector<1x128xf32>
    %c1 = arith.constant 1 : index
    %9 = memref.load %arg1[%c1] : memref<2xf32, #tpu.memory_space<smem>>
    %10 = vector.broadcast %9 : f32 to vector<1x128xf32>
    %cst_1 = arith.constant 2.000000e+01 : f32
    %11 = vector.broadcast %cst_1 : f32 to vector<1x128xf32>
    %12 = arith.cmpf ogt, %10, %11 : vector<1x128xf32>
    %cst_2 = arith.constant 2.000000e+01 : f32
    %13 = vector.broadcast %cst_2 : f32 to vector<1x128xf32>
    %14 = arith.minimumf %10, %13 : vector<1x128xf32>
    %15 = math.exp %14 : vector<1x128xf32>
    %16 = math.log1p %15 : vector<1x128xf32>
    %17 = arith.select %12, %10, %16 : vector<1x128xi1>, vector<1x128xf32>
    %18 = vector.shape_cast %8 : vector<1x128xf32> to vector<1x128xf32>
    %19 = vector.broadcast %18 : vector<1x128xf32> to vector<8x128xf32>
    %c0_3 = arith.constant 0 : index
    %c0_4 = arith.constant 0 : index
    %c0_5 = arith.constant 0 : index
    %20 = vector.load %arg2[%c0_3, %c0_4, %c0_5] : memref<2x8x128xf32, #tpu.memory_space<vmem>>, vector<1x8x128xf32>
    %21 = vector.shape_cast %20 : vector<1x8x128xf32> to vector<8x128xf32>
    %22 = vector.shape_cast %19 : vector<8x128xf32> to vector<1x8x128xf32>
    tpu.vector_store %arg2[%c0_3, %c0_4, %c0_5], %22 {strides = array<i32>} : memref<2x8x128xf32, #tpu.memory_space<vmem>>, vector<1x8x128xf32>,
    %23 = vector.shape_cast %17 : vector<1x128xf32> to vector<1x128xf32>
    %24 = vector.broadcast %23 : vector<1x128xf32> to vector<8x128xf32>
    %c1_6 = arith.constant 1 : index
    %c0_7 = arith.constant 0 : index
    %c0_8 = arith.constant 0 : index
    %25 = vector.load %arg2[%c1_6, %c0_7, %c0_8] : memref<2x8x128xf32, #tpu.memory_space<vmem>>, vector<1x8x128xf32>
    %26 = vector.shape_cast %25 : vector<1x8x128xf32> to vector<8x128xf32>
    %27 = vector.shape_cast %24 : vector<8x128xf32> to vector<1x8x128xf32>
    tpu.vector_store %arg2[%c1_6, %c0_7, %c0_8], %27 {strides = array<i32>} : memref<2x8x128xf32, #tpu.memory_space<vmem>>, vector<1x8x128xf32>,
    return
  }
  func.func @transform_0(%arg0: i32) -> i32 {
    %c0_i32 = arith.constant 0 : i32
    %c0_i32_0 = arith.constant 0 : i32
    return %c0_i32 : i32
  }
  func.func @transform_1(%arg0: i32) -> (i32, i32, i32) {
    %c0_i32 = arith.constant 0 : i32
    %c0_i32_0 = arith.constant 0 : i32
    %c0_i32_1 = arith.constant 0 : i32
    return %c0_i32, %arg0, %c0_i32_0 : i32, i32, i32
  }
}

</mosaic_0001>

<llo_original>
// kernel: tpu_custom_call.1
$region0: #{tpu_custom_call.1}
  #allocation0 [shape = 'u32[]', space=smem, size = 0x4, offset = 0x4, fixed_abs, tag = 'smem constant byte address 0x4 - core index']
  #allocation1 [shape = 'u32[144,128]{1,0:T(1,128)}', space=vmem, size = 0x12000, scoped, tag = 'internal scratch']
  %s0 = inlined_call_operand.hbm [shape: f32[2], index: 0, kind: input, shape index: {}]
  %s1 = inlined_call_operand.hbm [shape: f32[2,8,128], index: 1, kind: output, shape index: {}]
  %s2 = sld [smem:[#allocation0]]
  $region18: #{tpu_custom_call.1} parent=0
    _
  %s4 = ssub.s32 1, %s2
  %s5 = scalar_select 0, %s4, %s2
  $region1: #{tpu_custom_call.1} parent=0
    #allocation2 [shape = 'u8[512]{0}', space=smem, size = 0x200, scoped, tag = 'input window, operand 0, single buffered']
    #allocation3 [shape = 's32[1]{0}', space=sflag, size = 0x4, scoped, tag = 'scoped memory for tpu_custom_call.1']
    #allocation4 [shape = 's32[1]{0}', space=sflag, size = 0x4, scoped, tag = 'scoped memory for tpu_custom_call.1']
    #allocation5 [shape = 'u8[8192]{0}', space=vmem, size = 0x2000, scoped, tag = 'output window, operand 0, single buffered']
    %6 = vsyncpa [#allocation4], 0
    %7 = vsyncpa [#allocation3], 0
    // Predicated region
    $region2: #{tpu_custom_call.1} parent=1 // pred_check
      _
    $region3: #{tpu_custom_call.1} parent=1 // pred_check_branch
      %9 = sbr.rel (0) target = $region5
    $region4: #{tpu_custom_call.1} parent=1 // pred_region
      %s11 = ssub.s32 16, 16
      %12 = vsyncadd [#allocation4], %s11
      %15 = dma.hbm_to_smem %s0, 16, [#allocation2], [#allocation4]
    $region5: #{tpu_custom_call.1} parent=1 // pred_fallthru
      _
    // Predicated region
    $region6: #{tpu_custom_call.1} parent=1 // pred_check
      _
    $region7: #{tpu_custom_call.1} parent=1 // pred_check_branch
      %17 = sbr.rel (0) target = $region9
    $region8: #{tpu_custom_call.1} parent=1 // pred_region
      %18 = dma.done [#allocation4], 16
    $region9: #{tpu_custom_call.1} parent=1 // pred_fallthru
      _
    %19 = sfence
    %s20 = sld [smem:[#allocation2]]
    %v21 = vstv %s20
    %vm22 = vcmp.gt.f32.partialorder %v21, 20.0
    %v23 = vmin.f32 %v21, 20.0
    %v24 = vmul.f32 %v23, 1.442695
    %v25 = vpow.pop %v24
    %v26 = vadd.f32 %v25, 1.0
    %v27 = vlog2.pop %v26
    %v28 = vmul.f32 %v27, 0.6931472
    %v29 = vmul.f32 -0.5, %v25
    %v30 = vadd.f32 %v29, 1.0
    %v31 = vmul.f32 %v30, %v25
    %v32 = vand.u32 2147483647, %v25
    %vm33 = vcmp.lt.f32.partialorder %v32, 0.0004427343
    %v34 = vsel %vm33, %v31, %v28
    %v35 = vsel %vm22, %v21, %v34
    %s36 = sld [smem:[#allocation2 + $0x1]]
    %v37 = vstv %s36
    %vm38 = vcmp.gt.f32.partialorder %v37, 20.0
    %v39 = vmin.f32 %v37, 20.0
    %v40 = vmul.f32 %v39, 1.442695
    %v41 = vpow.pop %v40
    %v42 = vadd.f32 %v41, 1.0
    %v43 = vlog2.pop %v42
    %v44 = vmul.f32 %v43, 0.6931472
    %v45 = vmul.f32 -0.5, %v41
    %v46 = vadd.f32 %v45, 1.0
    %v47 = vmul.f32 %v46, %v41
    %v48 = vand.u32 2147483647, %v41
    %vm49 = vcmp.lt.f32.partialorder %v48, 0.0004427343
    %v50 = vsel %vm49, %v47, %v44
    %v51 = vsel %vm38, %v37, %v50
    %52 = vst [vmem:[#allocation5] sm:$0xff] %v35
    %s53 = scalar_lea.vmem [#allocation5], 8
    %54 = vst [vmem:[%s53] sm:$0xff] %v51
    // Predicated region
    $region10: #{tpu_custom_call.1} parent=1 // pred_check
      _
    $region11: #{tpu_custom_call.1} parent=1 // pred_check_branch
      %56 = sbr.rel (0) target = $region13
    $region12: #{tpu_custom_call.1} parent=1 // pred_region
      %s58 = ssub.s32 256, 256
      %59 = vsyncadd [#allocation3], %s58
      %s60 = sshll.u32 [#allocation5], 4
      %s61 = int_to_ptr.vmem [resolvable:$true] %s60
      %66 = dma.vmem_to_hbm [thread:$0]  %s61, 256, %s1, [#allocation3], 128, 128, 8
    $region13: #{tpu_custom_call.1} parent=1 // pred_fallthru
      _
    // Predicated region
    $region14: #{tpu_custom_call.1} parent=1 // pred_check
      _
    $region15: #{tpu_custom_call.1} parent=1 // pred_check_branch
      %68 = sbr.rel (0) target = $region17
    $region16: #{tpu_custom_call.1} parent=1 // pred_region
      %69 = dma.done [#allocation3], 256
    $region17: #{tpu_custom_call.1} parent=1 // pred_fallthru
      _
    %70 = vsyncpa [#allocation3], 1
    %71 = vsyncpa [#allocation4], 1

</llo_original>
